<compile_context>
chip_gen: v5e
topology: v5e:2x2
jax: 0.10.0
libtpu: 0.0.40
codegen_flags: <defaults>
</compile_context>

<pallas_src>
import functools

import jax
import jax.numpy as jnp
from jax.experimental import pallas as pl
from jax.experimental.pallas import tpu as pltpu

# ----------------------------- model config -----------------------------
INPUT_DIM = 32
HIDDEN_DIM = 32
OUTPUT_DIM = 8
N_LAYERS = 2          # number of applications of the SAME (shared) hidden Linear
DROP_PROB = 0.1       # nn.Dropout: identity in eval mode
SIGMOID = False       # stored by __init__, never used in forward()

GROUP = 16                      # original rows folded into one lane-dense slab row
K_BLK = GROUP * INPUT_DIM       # 512  (input lanes per slab row)
N_BLK = GROUP * OUTPUT_DIM      # 128  (output lanes per slab row)


# ----------------------------- Pallas kernel ----------------------------
def _neurnet_kernel(x_ref, w_ref, b_ref, o_ref, *, compute_dtype):
    # Cast the streamed tile in-kernel (VPU is idle in this mem-bound kernel),
    # one MXU push per tile: (tile, 512) @ (512, 128), fp32 accumulation.
    x = x_ref[...].astype(compute_dtype)
    acc = jnp.dot(x, w_ref[...], preferred_element_type=jnp.float32)
    # fp32 bias add in the epilogue, single cast to the output dtype.
    o_ref[...] = (acc + b_ref[...]).astype(o_ref.dtype)


# ----------------------- wrapper / weight pre-fusion ---------------------
def _fuse_affine(w_first, b_first, w_hidden, b_hidden, w_last, b_last, n_layers):
    """Collapse first -> hidden^n_layers -> last (no activations, dropout=identity)
    into a single (INPUT_DIM, OUTPUT_DIM) affine map.  Computed in fp32."""
    w_eff = w_first
    b_eff = b_first
    for _ in range(n_layers):
        w_eff = w_eff @ w_hidden
        b_eff = b_eff @ w_hidden + b_hidden
    w_eff = w_eff @ w_last
    b_eff = b_eff @ w_last + b_last
    return w_eff, b_eff


def _round_up(n, m):
    return ((n + m - 1) // m) * m


def _choose_tile_rows(rows, tile_rows_max):
    """Pick a slab-row tile: multiple of 8 (sublane rule) unless it is the full
    extent, capped by tile_rows_max, and split so v7x's 2 TCs both get work."""
    if rows <= 8:
        return rows                                   # single full-extent block
    cap = min(tile_rows_max, rows)
    cap = min(cap, _round_up((rows + 1) // 2, 8))     # >= 2 grid steps when possible
    cap = max(8, (cap // 8) * 8)                      # 8-align; trailing block clipped
    return cap


@functools.partial(jax.jit, static_argnames=("tile_rows", "compute_dtype", "out_dtype"))
def neurnet_forward(x, w_first, b_first, w_hidden, b_hidden, w_last, b_last,
                    *, tile_rows=4096, compute_dtype=jnp.bfloat16, out_dtype=None):
    """Mirrors NeurNet.forward in eval mode.

    x: any shape whose total size is divisible by INPUT_DIM (x.view(-1, i_d)).
    Weights are stored transposed vs. PyTorch, i.e. (in_features, out_features).
    tile_rows counts slab rows (each slab row == 16 original rows).
    """
    if out_dtype is None:
        out_dtype = compute_dtype

    x2d = x.reshape(-1, INPUT_DIM)
    m = x2d.shape[0]

    # Pre-fuse the whole network into one affine map (fp32, negligible cost).
    w_eff, b_eff = _fuse_affine(w_first, b_first, w_hidden, b_hidden,
                                w_last, b_last, N_LAYERS)

    # Lane-dense block-diagonal weight: 16 copies of W_eff on the diagonal.
    w_bd = jnp.kron(jnp.eye(GROUP, dtype=jnp.float32), w_eff).astype(compute_dtype)
    b_bd = jnp.tile(b_eff, GROUP).reshape(1, N_BLK).astype(jnp.float32)

    # Pad rows to a multiple of GROUP only if needed (demo path: no pad, no copy).
    pad = (-m) % GROUP
    if pad:
        x2d = jnp.concatenate(
            [x2d, jnp.zeros((pad, INPUT_DIM), x2d.dtype)], axis=0)
    rows = (m + pad) // GROUP
    # Contiguous reshape (free); x streamed in its NATIVE dtype, cast in-kernel.
    x_in = x2d.reshape(rows, K_BLK)

    t = _choose_tile_rows(rows, tile_rows)
    grid = (pl.cdiv(rows, t),)

    cost = pl.CostEstimate(
        flops=2 * rows * K_BLK * N_BLK,
        transcendentals=0,
        bytes_accessed=(x_in.size * x_in.dtype.itemsize
                        + w_bd.size * w_bd.dtype.itemsize
                        + b_bd.size * 4
                        + rows * N_BLK * jnp.dtype(out_dtype).itemsize),
    )

    out = pl.pallas_call(
        functools.partial(_neurnet_kernel, compute_dtype=compute_dtype),
        out_shape=jax.ShapeDtypeStruct((rows, N_BLK), out_dtype),
        grid_spec=pltpu.PrefetchScalarGridSpec(
            num_scalar_prefetch=0,
            grid=grid,
            in_specs=[
                pl.BlockSpec((t, K_BLK), lambda i: (i, 0)),       # x slab tile
                pl.BlockSpec((K_BLK, N_BLK), lambda i: (0, 0)),   # block-diag W (resident)
                pl.BlockSpec((1, N_BLK), lambda i: (0, 0)),       # tiled bias (resident)
            ],
            out_specs=pl.BlockSpec((t, N_BLK), lambda i: (i, 0)),
        ),
        compiler_params=pltpu.CompilerParams(
            dimension_semantics=("parallel",),        # shard batch tiles across TCs (v7x)
            vmem_limit_bytes=32 * 1024 * 1024,        # default tile fits on v5e/v6e/v7x
        ),
        cost_estimate=cost,
    )(x_in, w_bd, b_bd)

    out = out.reshape(rows * GROUP, OUTPUT_DIM)       # free contiguous reshape
    if pad:
        out = out[:m]
    return out


# ----------------------------- reference (pure JAX) ----------------------
def neurnet_ref(x, w_first, b_first, w_hidden, b_hidden, w_last, b_last):
    """Layer-by-layer fp32 reference matching the PyTorch module in eval mode."""
    h = x.reshape(-1, INPUT_DIM) @ w_first + b_first
    for _ in range(N_LAYERS):
        h = h @ w_hidden + b_hidden
    return h @ w_last + b_last


# --------------------------------- main ----------------------------------
if __name__ == "__main__":
    key = jax.random.PRNGKey(0)
    kx, kb, kr, k1, k2, k3, k4, k5, k6 = jax.random.split(key, 9)

    # Deterministic PyTorch-like uniform init, stored as (in_features, out_features).
    def init_linear(kw, kkb, fan_in, fan_out):
        bound = 1.0 / (fan_in ** 0.5)
        w = jax.random.uniform(kw, (fan_in, fan_out), jnp.float32, -bound, bound)
        b = jax.random.uniform(kkb, (fan_out,), jnp.float32, -bound, bound)
        return w, b

    w_first, b_first = init_linear(k1, k2, INPUT_DIM, HIDDEN_DIM)
    w_hidden, b_hidden = init_linear(k3, k4, HIDDEN_DIM, HIDDEN_DIM)
    w_last, b_last = init_linear(k5, k6, HIDDEN_DIM, OUTPUT_DIM)
    params = (w_first, b_first, w_hidden, b_hidden, w_last, b_last)

    # 1) Spec-shape input: (2, 4, 16, 16) -> 2048 elems -> view(-1, 32) -> (64, 32).
    x = jax.random.normal(kx, (2, 4, 16, 16), dtype=jnp.float32)
    ref = neurnet_ref(x, *params)

    # fp32 compute path: matches layer-by-layer reference (up to weight pre-fusion
    # reassociation).
    out_f32 = jax.block_until_ready(
        neurnet_forward(x, *params, compute_dtype=jnp.float32))
    assert out_f32.shape == (64, OUTPUT_DIM), out_f32.shape
    assert jnp.allclose(out_f32, ref, atol=1e-4, rtol=1e-4), \
        "fp32 kernel mismatch vs pure-JAX reference"

    # Default fast path: bf16 operands + bf16 output, fp32 MXU accumulation.
    out_bf16 = jax.block_until_ready(neurnet_forward(x, *params))
    assert out_bf16.shape == (64, OUTPUT_DIM), out_bf16.shape
    assert out_bf16.dtype == jnp.bfloat16
    assert jnp.allclose(out_bf16.astype(jnp.float32), ref, atol=5e-2, rtol=5e-2), \
        "bf16 kernel mismatch vs pure-JAX reference"

    # 2) Larger batch exercising a real multi-step pipelined grid (rows=32, tile=8 -> 4 steps).
    x_big = jax.random.normal(kb, (16, 4, 16, 16), dtype=jnp.float32)
    ref_big = neurnet_ref(x_big, *params)
    out_big = jax.block_until_ready(
        neurnet_forward(x_big, *params, tile_rows=8, compute_dtype=jnp.float32))
    assert out_big.shape == (512, OUTPUT_DIM), out_big.shape
    assert jnp.allclose(out_big, ref_big, atol=1e-4, rtol=1e-4), \
        "multi-step fp32 kernel mismatch vs pure-JAX reference"

    # 3) Row count NOT a multiple of 16 -> exercises the padding/slice path.
    x_rag = jax.random.normal(kr, (40, INPUT_DIM), dtype=jnp.float32)
    ref_rag = neurnet_ref(x_rag, *params)
    out_rag = jax.block_until_ready(
        neurnet_forward(x_rag, *params, compute_dtype=jnp.float32))
    assert out_rag.shape == (40, OUTPUT_DIM), out_rag.shape
    assert jnp.allclose(out_rag, ref_rag, atol=1e-4, rtol=1e-4), \
        "ragged fp32 kernel mismatch vs pure-JAX reference"

    print("KERNEL_OK")
</pallas_src>

<mosaic_0001>
module attributes {stable_mosaic.version = 11 : i64} {
  func.func @_neurnet_kernel(%arg0: i32, %arg1: memref<4x512xf32, #tpu.memory_space<vmem>>, %arg2: memref<512x128xf32, #tpu.memory_space<vmem>>, %arg3: memref<1x128xf32, #tpu.memory_space<vmem>>, %arg4: memref<4x128xf32, #tpu.memory_space<vmem>>) attributes {dimension_semantics = [#tpu.dimension_semantics<parallel>], iteration_bounds = array<i64: 1>, scalar_prefetch = 0 : i64, scratch_operands = 0 : i64, tpu.core_type = #tpu.core_type<tc>, window_params = [{transform_indices = @transform_0, window_bounds = array<i64: 4, 512>}, {pipeline_mode = #tpu.pipeline_mode<synchronous>, transform_indices = @transform_1, window_bounds = array<i64: 512, 128>}, {pipeline_mode = #tpu.pipeline_mode<synchronous>, transform_indices = @transform_2, window_bounds = array<i64: 1, 128>}, {transform_indices = @transform_3, window_bounds = array<i64: 4, 128>}]} {
    %c0 = arith.constant 0 : index
    %c0_0 = arith.constant 0 : index
    %0 = vector.load %arg1[%c0, %c0_0] : memref<4x512xf32, #tpu.memory_space<vmem>>, vector<4x512xf32>
    %c0_1 = arith.constant 0 : index
    %c0_2 = arith.constant 0 : index
    %1 = vector.load %arg2[%c0_1, %c0_2] : memref<512x128xf32, #tpu.memory_space<vmem>>, vector<512x128xf32>
    %cst = arith.constant dense<0.000000e+00> : vector<4x128xf32>
    %2 = tpu.matmul %0, %1, %cst {dimension_numbers = #tpu.dot_dimension_numbers<[1], [0], [0], [1], [0, 0, 1, 1], [], []>} : vector<4x512xf32>, vector<512x128xf32>, vector<4x128xf32> -> vector<4x128xf32>
    %c0_3 = arith.constant 0 : index
    %c0_4 = arith.constant 0 : index
    %3 = vector.load %arg3[%c0_3, %c0_4] : memref<1x128xf32, #tpu.memory_space<vmem>>, vector<1x128xf32>
    %4 = vector.broadcast %3 : vector<1x128xf32> to vector<4x128xf32>
    %5 = arith.addf %2, %4 : vector<4x128xf32>
    %c0_5 = arith.constant 0 : index
    %c0_6 = arith.constant 0 : index
    %6 = vector.load %arg4[%c0_5, %c0_6] : memref<4x128xf32, #tpu.memory_space<vmem>>, vector<4x128xf32>
    tpu.vector_store %arg4[%c0_5, %c0_6], %5 {strides = array<i32>} : memref<4x128xf32, #tpu.memory_space<vmem>>, vector<4x128xf32>,
    return
  }
  func.func @transform_0(%arg0: i32) -> (i32, i32) {
    %c0_i32 = arith.constant 0 : i32
    %c0_i32_0 = arith.constant 0 : i32
    return %arg0, %c0_i32 : i32, i32
  }
  func.func @transform_1(%arg0: i32) -> (i32, i32) {
    %c0_i32 = arith.constant 0 : i32
    %c0_i32_0 = arith.constant 0 : i32
    %c0_i32_1 = arith.constant 0 : i32
    return %c0_i32, %c0_i32_0 : i32, i32
  }
  func.func @transform_2(%arg0: i32) -> (i32, i32) {
    %c0_i32 = arith.constant 0 : i32
    %c0_i32_0 = arith.constant 0 : i32
    %c0_i32_1 = arith.constant 0 : i32
    return %c0_i32, %c0_i32_0 : i32, i32
  }
  func.func @transform_3(%arg0: i32) -> (i32, i32) {
    %c0_i32 = arith.constant 0 : i32
    %c0_i32_0 = arith.constant 0 : i32
    return %arg0, %c0_i32 : i32, i32
  }
}

</mosaic_0001>

<llo_original>
// kernel: tile.8
$region0: #{tile.8}
  #allocation0 [shape = 's32[1]{0}', space=sflag, size = 0x4, scoped, tag = 'scoped memory for tile.8']
  %s0 = inlined_call_operand.vmem [shape: f32[8], index: 0, kind: input, shape index: {}]
  %s1 = inlined_call_operand.vmem [shape: f32[16,8], index: 1, kind: output, shape index: {}]
  // Predicated region
  $region2: #{tile.8} parent=0 // pred_check
    _
  $region3: #{tile.8} parent=0 // pred_check_branch
    %3 = sbr.rel (0) target = $region5
  $region4: #{tile.8} parent=0 // pred_region
    _
  $region5: #{tile.8} parent=0 // pred_fallthru
    _
  %v4 = vld [vmem:[%s0] ss:$0 sm:$0xff]
  %5 = vst [vmem:[%s1] sm:$0xff] %v4
  %s6 = scalar_lea.vmem %s1, 8
  %7 = vst [vmem:[%s6] sm:$0xff] %v4

// kernel: tile.9
$region0: #{tile.9}
  %s0 = inlined_call_operand.vmem [shape: f32[16,8], index: 0, kind: input, shape index: {}]
  %s1 = inlined_call_operand.vmem [shape: f32[1,128], index: 1, kind: output, shape index: {}]
  $region1: #{tile.9} parent=0
    #allocation0 [shape = 'u8[4096]{0}', space=vmem, size = 0x1000, scoped, tag = 'scoped mem for output reshape']
    %v2 = vld [vmem:[%s0] sm:$0x1]
    %vm3 = vcmask 64512
    %4 = vst.msk [vmem:[#allocation0] sm:$0x1] %vm3, %v2
    %s5 = scalar_lea.vmem %s0, 15
    %v6 = vld [vmem:[%s5] sm:$0x1]
    %7 = vrot.lane.b32.xlu0 %v6, 120
    %v8 = vpop.permute.xlu0 %7
    %vm9 = vcmask 1048512
    %10 = vst.msk [vmem:[#allocation0] sm:$0x1] %vm9, %v8
    %s11 = scalar_lea.vmem %s0, 14
    %v12 = vld [vmem:[%s11] sm:$0x1]
    %13 = vrot.lane.b32.xlu0 %v12, 112
    %v14 = vpop.permute.xlu0 %13
    %vm15 = vcmask 982912
    %16 = vst.msk [vmem:[#allocation0] sm:$0x1] %vm15, %v14
    %s17 = scalar_lea.vmem %s0, 13
    %v18 = vld [vmem:[%s17] sm:$0x1]
    %19 = vrot.lane.b32.xlu0 %v18, 104
    %v20 = vpop.permute.xlu0 %19
    %vm21 = vcmask 917312
    %22 = vst.msk [vmem:[#allocation0] sm:$0x1] %vm21, %v20
    %s23 = scalar_lea.vmem %s0, 12
    %v24 = vld [vmem:[%s23] sm:$0x1]
    %25 = vrot.lane.b32.xlu0 %v24, 96
    %v26 = vpop.permute.xlu0 %25
    %vm27 = vcmask 851712
    %28 = vst.msk [vmem:[#allocation0] sm:$0x1] %vm27, %v26
    %s29 = scalar_lea.vmem %s0, 11
    %v30 = vld [vmem:[%s29] sm:$0x1]
    %31 = vrot.lane.b32.xlu0 %v30, 88
    %v32 = vpop.permute.xlu0 %31
    %vm33 = vcmask 786112
    %34 = vst.msk [vmem:[#allocation0] sm:$0x1] %vm33, %v32
    %s35 = scalar_lea.vmem %s0, 10
    %v36 = vld [vmem:[%s35] sm:$0x1]
    %37 = vrot.lane.b32.xlu0 %v36, 80
    %v38 = vpop.permute.xlu0 %37
    %vm39 = vcmask 720512
    %40 = vst.msk [vmem:[#allocation0] sm:$0x1] %vm39, %v38
    %s41 = scalar_lea.vmem %s0, 9
    %v42 = vld [vmem:[%s41] sm:$0x1]
    %43 = vrot.lane.b32.xlu0 %v42, 72
    %v44 = vpop.permute.xlu0 %43
    %vm45 = vcmask 654912
    %46 = vst.msk [vmem:[#allocation0] sm:$0x1] %vm45, %v44
    %s47 = scalar_lea.vmem %s0, 8
    %v48 = vld [vmem:[%s47] sm:$0x1]
    %49 = vrot.lane.b32.xlu0 %v48, 64
    %v50 = vpop.permute.xlu0 %49
    %vm51 = vcmask 589312
    %52 = vst.msk [vmem:[#allocation0] sm:$0x1] %vm51, %v50
    %s53 = scalar_lea.vmem %s0, 7
    %v54 = vld [vmem:[%s53] sm:$0x1]
    %55 = vrot.lane.b32.xlu0 %v54, 56
    %v56 = vpop.permute.xlu0 %55
    %vm57 = vcmask 523712
    %58 = vst.msk [vmem:[#allocation0] sm:$0x1] %vm57, %v56
    %s59 = scalar_lea.vmem %s0, 6
    %v60 = vld [vmem:[%s59] sm:$0x1]
    %61 = vrot.lane.b32.xlu0 %v60, 48
    %v62 = vpop.permute.xlu0 %61
    %vm63 = vcmask 458112
    %64 = vst.msk [vmem:[#allocation0] sm:$0x1] %vm63, %v62
    %s65 = scalar_lea.vmem %s0, 5
    %v66 = vld [vmem:[%s65] sm:$0x1]
    %67 = vrot.lane.b32.xlu0 %v66, 40
    %v68 = vpop.permute.xlu0 %67
    %vm69 = vcmask 392512
    %70 = vst.msk [vmem:[#allocation0] sm:$0x1] %vm69, %v68
    %s71 = scalar_lea.vmem %s0, 4
    %v72 = vld [vmem:[%s71] sm:$0x1]
    %73 = vrot.lane.b32.xlu0 %v72, 32
    %v74 = vpop.permute.xlu0 %73
    %vm75 = vcmask 326912
    %76 = vst.msk [vmem:[#allocation0] sm:$0x1] %vm75, %v74
    %s77 = scalar_lea.vmem %s0, 3
    %v78 = vld [vmem:[%s77] sm:$0x1]
    %79 = vrot.lane.b32.xlu0 %v78, 24
    %v80 = vpop.permute.xlu0 %79
    %vm81 = vcmask 261312
    %82 = vst.msk [vmem:[#allocation0] sm:$0x1] %vm81, %v80
    %s83 = scalar_lea.vmem %s0, 2
    %v84 = vld [vmem:[%s83] sm:$0x1]
    %85 = vrot.lane.b32.xlu0 %v84, 16
    %v86 = vpop.permute.xlu0 %85
    %vm87 = vcmask 195712
    %88 = vst.msk [vmem:[#allocation0] sm:$0x1] %vm87, %v86
    %s89 = scalar_lea.vmem %s0, 1
    %v90 = vld [vmem:[%s89] sm:$0x1]
    %91 = vrot.lane.b32.xlu0 %v90, 8
    %v92 = vpop.permute.xlu0 %91
    %vm93 = vcmask 130112
    %94 = vst.msk [vmem:[#allocation0] sm:$0x1] %vm93, %v92
    %s96 = ssub.s32 2, 1
    %v97 = vld [vmem:[#allocation0] sm:%s96]
    %s99 = ssub.s32 2, 1
    %100 = vst [vmem:[%s1] sm:%s99] %v97

// kernel: neurnet_forward.1
$region0: #{neurnet_forward.1}
  #allocation0 [shape = 'u32[]', space=smem, size = 0x4, offset = 0x4, fixed_abs, tag = 'smem constant byte address 0x4 - core index']
  #allocation1 [shape = 'u32[72,128]{1,0:T(1,128)}', space=vmem, size = 0x9000, scoped, tag = 'internal scratch']
  %s0 = inlined_call_operand.vmem [shape: f32[4,512], index: 0, kind: input, shape index: {}]
  %s1 = inlined_call_operand.vmem [shape: f32[512,128], index: 1, kind: input, shape index: {}]
  %s2 = inlined_call_operand.vmem [shape: f32[1,128], index: 2, kind: input, shape index: {}]
  %s3 = inlined_call_operand.vmem [shape: f32[4,128], index: 3, kind: output, shape index: {}]
  %s4 = sld [smem:[#allocation0]]
  $region22: #{neurnet_forward.1} parent=0
    _
  %s6 = ssub.s32 1, %s4
  %s7 = scalar_select 0, %s6, %s4
  // Predicated region
  $region2: #{neurnet_forward.1} parent=0 // pred_check
    _
  $region3: #{neurnet_forward.1} parent=0 // pred_check_branch
    %9 = sbr.rel (0) target = $region5
  $region4: #{neurnet_forward.1} parent=0 // pred_region
    _
  $region5: #{neurnet_forward.1} parent=0 // pred_fallthru
    _
  // Predicated region
  $region6: #{neurnet_forward.1} parent=0 // pred_check
    _
  $region7: #{neurnet_forward.1} parent=0 // pred_check_branch
    %11 = sbr.rel (0) target = $region9
  $region8: #{neurnet_forward.1} parent=0 // pred_region
    _
  $region9: #{neurnet_forward.1} parent=0 // pred_fallthru
    _
  // Predicated region
  $region10: #{neurnet_forward.1} parent=0 // pred_check
    _
  $region11: #{neurnet_forward.1} parent=0 // pred_check_branch
    %13 = sbr.rel (0) target = $region13
  $region12: #{neurnet_forward.1} parent=0 // pred_region
    _
  $region13: #{neurnet_forward.1} parent=0 // pred_fallthru
    _
  %v14 = vld [vmem:[%s0] sm:$0xff]
  %v15 = vld [vmem:[%s0 + $0x8] sm:$0xff]
  %v16 = vld [vmem:[%s1] sm:$0xff]
  %v17 = vld [vmem:[%s1 + $0x8] sm:$0xff]
  %v18 = vld [vmem:[%s1 + $0x10] sm:$0xff]
  %v19 = vld [vmem:[%s1 + $0x18] sm:$0xff]
  %v20 = vld [vmem:[%s1 + $0x20] sm:$0xff]
  %v21 = vld [vmem:[%s1 + $0x28] sm:$0xff]
  %v22 = vld [vmem:[%s1 + $0x30] sm:$0xff]
  %v23 = vld [vmem:[%s1 + $0x38] sm:$0xff]
  %v24 = vld [vmem:[%s1 + $0x40] sm:$0xff]
  %v25 = vld [vmem:[%s1 + $0x48] sm:$0xff]
  %v26 = vld [vmem:[%s1 + $0x50] sm:$0xff]
  %v27 = vld [vmem:[%s1 + $0x58] sm:$0xff]
  %v28 = vld [vmem:[%s1 + $0x60] sm:$0xff]
  %v29 = vld [vmem:[%s1 + $0x68] sm:$0xff]
  %v30 = vld [vmem:[%s1 + $0x70] sm:$0xff]
  %v31 = vld [vmem:[%s1 + $0x78] sm:$0xff]
  %v32 = vld [vmem:[%s1 + $0x80] sm:$0xff]
  %v33 = vld [vmem:[%s1 + $0x88] sm:$0xff]
  %v34 = vld [vmem:[%s1 + $0x90] sm:$0xff]
  %v35 = vld [vmem:[%s1 + $0x98] sm:$0xff]
  %v36 = vld [vmem:[%s1 + $0xa0] sm:$0xff]
  %v37 = vld [vmem:[%s1 + $0xa8] sm:$0xff]
  %v38 = vld [vmem:[%s1 + $0xb0] sm:$0xff]
  %v39 = vld [vmem:[%s1 + $0xb8] sm:$0xff]
  %v40 = vld [vmem:[%s1 + $0xc0] sm:$0xff]
  %v41 = vld [vmem:[%s1 + $0xc8] sm:$0xff]
  %v42 = vld [vmem:[%s1 + $0xd0] sm:$0xff]
  %v43 = vld [vmem:[%s1 + $0xd8] sm:$0xff]
  %v44 = vld [vmem:[%s1 + $0xe0] sm:$0xff]
  %v45 = vld [vmem:[%s1 + $0xe8] sm:$0xff]
  %v46 = vld [vmem:[%s1 + $0xf0] sm:$0xff]
  %v47 = vld [vmem:[%s1 + $0xf8] sm:$0xff]
  %v48 = vld [vmem:[%s1 + $0x100] sm:$0xff]
  %v49 = vld [vmem:[%s1 + $0x108] sm:$0xff]
  %v50 = vld [vmem:[%s1 + $0x110] sm:$0xff]
  %v51 = vld [vmem:[%s1 + $0x118] sm:$0xff]
  %v52 = vld [vmem:[%s1 + $0x120] sm:$0xff]
  %v53 = vld [vmem:[%s1 + $0x128] sm:$0xff]
  %v54 = vld [vmem:[%s1 + $0x130] sm:$0xff]
  %v55 = vld [vmem:[%s1 + $0x138] sm:$0xff]
  %v56 = vld [vmem:[%s1 + $0x140] sm:$0xff]
  %v57 = vld [vmem:[%s1 + $0x148] sm:$0xff]
  %v58 = vld [vmem:[%s1 + $0x150] sm:$0xff]
  %v59 = vld [vmem:[%s1 + $0x158] sm:$0xff]
  %v60 = vld [vmem:[%s1 + $0x160] sm:$0xff]
  %v61 = vld [vmem:[%s1 + $0x168] sm:$0xff]
  %v62 = vld [vmem:[%s1 + $0x170] sm:$0xff]
  %v63 = vld [vmem:[%s1 + $0x178] sm:$0xff]
  %v64 = vld [vmem:[%s1 + $0x180] sm:$0xff]
  %v65 = vld [vmem:[%s1 + $0x188] sm:$0xff]
  %v66 = vld [vmem:[%s1 + $0x190] sm:$0xff]
  %v67 = vld [vmem:[%s1 + $0x198] sm:$0xff]
  %v68 = vld [vmem:[%s1 + $0x1a0] sm:$0xff]
  %v69 = vld [vmem:[%s1 + $0x1a8] sm:$0xff]
  %v70 = vld [vmem:[%s1 + $0x1b0] sm:$0xff]
  %v71 = vld [vmem:[%s1 + $0x1b8] sm:$0xff]
  %v72 = vld [vmem:[%s1 + $0x1c0] sm:$0xff]
  %v73 = vld [vmem:[%s1 + $0x1c8] sm:$0xff]
  %v74 = vld [vmem:[%s1 + $0x1d0] sm:$0xff]
  %v75 = vld [vmem:[%s1 + $0x1d8] sm:$0xff]
  %v76 = vld [vmem:[%s1 + $0x1e0] sm:$0xff]
  %v77 = vld [vmem:[%s1 + $0x1e8] sm:$0xff]
  %v78 = vld [vmem:[%s1 + $0x1f0] sm:$0xff]
  %v79 = vld [vmem:[%s1 + $0x1f8] sm:$0xff]
  %v80 = vld [vmem:[%s2] sm:$0x1]
  %v82 = vperm.slane %v80, 0
  %86 = vst [vmem:[#allocation1] ss:$2 sm:$0xff] %v14
  %s87 = scalar_lea.vmem [#allocation1], 16
  %88 = vst [vmem:[%s87] ss:$2 sm:$0xff] %v15
  %v89 = vld.sshfl [vmem:[#allocation1] sm:$0xff pattern:$0x75316420]
  %v90 = vld.sshfl [vmem:[#allocation1 + $0x8] sm:$0xff pattern:$0x75316420]
  %v91 = vld.sshfl [vmem:[#allocation1 + $0x10] sm:$0xff pattern:$0x75316420]
  %v92 = vld.sshfl [vmem:[#allocation1 + $0x18] sm:$0xff pattern:$0x75316420]
  %97 = vmatpush.msra.mxu0 %v31
  %98 = vmatpush.msra.mxu0 %v30
  %99 = vmatpush.msra.mxu0 %v29
  %100 = vmatpush.msra.mxu0 %v28
  %101 = vmatpush.msra.mxu0 %v27
  %102 = vmatpush.msra.mxu0 %v26
  %103 = vmatpush.msra.mxu0 %v25
  %104 = vmatpush.msra.mxu0 %v24
  %105 = vmatpush.msra.mxu0 %v23
  %106 = vmatpush.msra.mxu0 %v22
  %107 = vmatpush.msra.mxu0 %v21
  %108 = vmatpush.msra.mxu0 %v20
  %109 = vmatpush.msra.mxu0 %v19
  %110 = vmatpush.msra.mxu0 %v18
  %111 = vmatpush.msra.mxu0 %v17
  %112 = vmatpush.msra.mxu0 %v16
  %113 = vmatmul.f32.gmra.mxu0 %v89
  %v114 = vpop.f32.mrf.mxu0
  %v115 = vadd.f32 %v82, %v114
  %116 = vdwg.mxu0
  %117 = vmatpush.msra.mxu0 %v47
  %118 = vmatpush.msra.mxu0 %v46
  %119 = vmatpush.msra.mxu0 %v45
  %120 = vmatpush.msra.mxu0 %v44
  %121 = vmatpush.msra.mxu0 %v43
  %122 = vmatpush.msra.mxu0 %v42
  %123 = vmatpush.msra.mxu0 %v41
  %124 = vmatpush.msra.mxu0 %v40
  %125 = vmatpush.msra.mxu0 %v39
  %126 = vmatpush.msra.mxu0 %v38
  %127 = vmatpush.msra.mxu0 %v37
  %128 = vmatpush.msra.mxu0 %v36
  %129 = vmatpush.msra.mxu0 %v35
  %130 = vmatpush.msra.mxu0 %v34
  %131 = vmatpush.msra.mxu0 %v33
  %132 = vmatpush.msra.mxu0 %v32
  %133 = vmatmul.f32.gmra.mxu0 %v90
  %v134 = vpop.f32.mrf.mxu0
  %v135 = vadd.f32 %v115, %v134
  %136 = vdwg.mxu0
  %137 = vmatpush.msra.mxu0 %v63
  %138 = vmatpush.msra.mxu0 %v62
  %139 = vmatpush.msra.mxu0 %v61
  %140 = vmatpush.msra.mxu0 %v60
  %141 = vmatpush.msra.mxu0 %v59
  %142 = vmatpush.msra.mxu0 %v58
  %143 = vmatpush.msra.mxu0 %v57
  %144 = vmatpush.msra.mxu0 %v56
  %145 = vmatpush.msra.mxu0 %v55
  %146 = vmatpush.msra.mxu0 %v54
  %147 = vmatpush.msra.mxu0 %v53
  %148 = vmatpush.msra.mxu0 %v52
  %149 = vmatpush.msra.mxu0 %v51
  %150 = vmatpush.msra.mxu0 %v50
  %151 = vmatpush.msra.mxu0 %v49
  %152 = vmatpush.msra.mxu0 %v48
  %153 = vmatmul.f32.gmra.mxu0 %v91
  %v154 = vpop.f32.mrf.mxu0
  %v155 = vadd.f32 %v135, %v154
  %156 = vdwg.mxu0
  %157 = vmatpush.msra.mxu0 %v79
  %158 = vmatpush.msra.mxu0 %v78
  %159 = vmatpush.msra.mxu0 %v77
  %160 = vmatpush.msra.mxu0 %v76
  %161 = vmatpush.msra.mxu0 %v75
  %162 = vmatpush.msra.mxu0 %v74
  %163 = vmatpush.msra.mxu0 %v73
  %164 = vmatpush.msra.mxu0 %v72
  %165 = vmatpush.msra.mxu0 %v71
  %166 = vmatpush.msra.mxu0 %v70
  %167 = vmatpush.msra.mxu0 %v69
  %168 = vmatpush.msra.mxu0 %v68
  %169 = vmatpush.msra.mxu0 %v67
  %170 = vmatpush.msra.mxu0 %v66
  %171 = vmatpush.msra.mxu0 %v65
  %172 = vmatpush.msra.mxu0 %v64
  %173 = vmatmul.f32.gmra.mxu0 %v92
  %v174 = vpop.f32.mrf.mxu0
  %v175 = vadd.f32 %v155, %v174
  %176 = vdwg.mxu0
  %177 = vst [vmem:[%s3] sm:$0xf] %v175
  // Predicated region
  $region14: #{neurnet_forward.1} parent=0 // pred_check
    _
  $region15: #{neurnet_forward.1} parent=0 // pred_check_branch
    %179 = sbr.rel (0) target = $region17
  $region16: #{neurnet_forward.1} parent=0 // pred_region
    _
  $region17: #{neurnet_forward.1} parent=0 // pred_fallthru
    _
  // Predicated region
  $region18: #{neurnet_forward.1} parent=0 // pred_check
    _
  $region19: #{neurnet_forward.1} parent=0 // pred_check_branch
    %181 = sbr.rel (0) target = $region21
  $region20: #{neurnet_forward.1} parent=0 // pred_region
    _
  $region21: #{neurnet_forward.1} parent=0 // pred_fallthru
    _

</llo_original>
